<compile_context>
chip_gen: v5e
topology: v5e:2x2
jax: 0.10.0
libtpu: 0.0.40
codegen_flags: <defaults>
</compile_context>

<pallas_src>
import functools

import jax
import jax.numpy as jnp
from jax import lax
from jax.experimental import pallas as pl
from jax.experimental.pallas import tpu as pltpu


# ~1M elements per input tile (~4 MiB f32, ~2 MiB bf16).  Working set:
# 2x double-buffered input + ~2-3x tile-sized f32 diff temporaries + tiny
# accumulators  <=  ~20 MiB, under the 32 MiB scoped VMEM limit below on every
# generation (v5e/v6e: 128 MiB physical; v7x: 64 MiB physical, 32 MiB scoped).
_TILE_ELEMS = 1 << 20
_VMEM_LIMIT_BYTES = 32 * 1024 * 1024


def _sublane_align(itemsize):
    # Sub-32-bit dtypes pack along sublanes: f32 -> 8 rows/vreg, bf16/f16 -> 16,
    # int8/fp8 -> 32.
    return 8 * max(1, 4 // max(1, itemsize))


def _diff_f32(a, b):
    """a - b with f32 result.

    For float inputs the subtraction runs in the native dtype (exact-ish for
    nearby values; halves VPU width for bf16 on v6e/v7x) and only the result is
    widened; other dtypes are widened first.
    """
    if a.dtype in (jnp.float32, jnp.bfloat16, jnp.float16):
        return (a - b).astype(jnp.float32)
    return a.astype(jnp.float32) - b.astype(jnp.float32)


# ---------------------------------------------------------------------------
# General path: grid (bc_blocks, h_tiles), exact halo carry across H-tiles.
# ---------------------------------------------------------------------------
def _tv_tiled_kernel(x_ref, out_ref, carry_ref, *, h_total, needs_mask):
    """TV partial sums for one (TBC, TH, W) slab of TBC (b, c) planes.

    INVARIANT: the h-tile axis must remain the innermost grid axis and be
    marked "arbitrary"; the carry scratch holds the last row of the previous
    h-tile of the SAME bc-block and is only correct because those tiles run
    back-to-back on one core.

    x_ref:     (TBC, TH, W)  input tile, original dtype.
    out_ref:   (1, 2, W)     f32 lane accumulators, resident across h-tiles:
                             row 0 = height-diff partials, row 1 = width-diff
                             partials (lane W-1 of row 1 stays 0).
    carry_ref: (TBC, 1, W)   f32 last row of the previous h-tile (halo).
    """
    ht = pl.program_id(1)
    n_ht = pl.num_programs(1)
    tbc, th, w = x_ref.shape

    @pl.when(ht == 0)
    def _init():
        out_ref[...] = jnp.zeros_like(out_ref)

    def accumulate(rows_valid):
        # rows_valid: None (all TH rows valid) or traced count of valid rows.
        if th >= 2:
            dh = _diff_f32(x_ref[:, 1:th, :], x_ref[:, 0:th - 1, :])
            dh2 = dh * dh
            if rows_valid is not None:
                rid = lax.broadcasted_iota(jnp.int32, dh2.shape, 1)
                dh2 = jnp.where(rid + 1 < rows_valid, dh2, 0.0)
            out_ref[0, 0:1, :] += jnp.sum(dh2, axis=(0, 1))[None, :]
        if w >= 2:
            dw = _diff_f32(x_ref[:, :, 1:w], x_ref[:, :, 0:w - 1])
            dw2 = dw * dw
            if rows_valid is not None:
                rid = lax.broadcasted_iota(jnp.int32, dw2.shape, 1)
                dw2 = jnp.where(rid < rows_valid, dw2, 0.0)
            out_ref[0, 1:2, 0:w - 1] += jnp.sum(dw2, axis=(0, 1))[None, :]

    if needs_mask:
        # Only the last h-tile is ragged; every other tile takes the mask-free
        # fast path (saves the iota/cmp/select VALU work in steady state).
        @pl.when(ht != n_ht - 1)
        def _fast():
            accumulate(None)

        @pl.when(ht == n_ht - 1)
        def _ragged():
            accumulate(h_total - ht * th)
    else:
        accumulate(None)

    # Height diff across the h-tile boundary (halo row from the previous tile).
    @pl.when(ht > 0)
    def _halo():
        bd = x_ref[:, 0:1, :].astype(jnp.float32) - carry_ref[...]
        out_ref[0, 0:1, :] += jnp.sum(bd * bd, axis=(0, 1))[None, :]

    # Stash this tile's last row for the next tile of the same bc-block.
    # Never written from the (garbage-padded) ragged last tile; never read at
    # ht == 0, so the plane-block transition is safe.
    @pl.when(ht + 1 < n_ht)
    def _save():
        carry_ref[...] = x_ref[:, th - 1:th, :].astype(jnp.float32)


# ---------------------------------------------------------------------------
# Narrow-W path: whole planes, lane-folded to (H/k, k*W) for lane density.
# ---------------------------------------------------------------------------
def _tv_folded_kernel(x_ref, out_ref, *, w, k):
    """TV partial sums for TBC whole planes in lane-folded layout.

    The wrapper reshaped each (H, W) plane (row-major, free) to (H//k, k*W):
    folded row r holds original rows r*k .. r*k+k-1 side by side along lanes.

    x_ref:   (TBC, HF, k*W)  original dtype (one block = whole folded planes).
    out_ref: (1, 2, k*W)     f32: row 0 = height partials, row 1 = width
                             partials per lane.
    """
    tbc, hf, kw = x_ref.shape
    out_ref[...] = jnp.zeros_like(out_ref)

    # Width diffs: adjacent lanes, skipping pairs that straddle an original-row
    # (w-wide) segment boundary.  w divides 128 here, so it is a power of two.
    if w >= 2:
        dw = _diff_f32(x_ref[:, :, 1:kw], x_ref[:, :, 0:kw - 1])
        dw2 = dw * dw
        lid = lax.broadcasted_iota(jnp.int32, dw2.shape, 2)
        dw2 = jnp.where((lid & (w - 1)) != (w - 1), dw2, 0.0)
        out_ref[0, 1:2, 0:kw - 1] += jnp.sum(dw2, axis=(0, 1))[None, :]

    # Height diffs between original rows folded into the SAME folded row:
    # segment s+1 minus segment s  ->  lane offset +w.  (k >= 2 by plan.)
    dhi = _diff_f32(x_ref[:, :, w:kw], x_ref[:, :, 0:(k - 1) * w])
    dhi2 = dhi * dhi
    out_ref[0, 0:1, 0:(k - 1) * w] += jnp.sum(dhi2, axis=(0, 1))[None, :]

    # Height diffs across folded rows: first segment of folded row r+1 minus
    # last segment of folded row r.
    if hf >= 2:
        dhx = _diff_f32(x_ref[:, 1:hf, 0:w], x_ref[:, 0:hf - 1, (k - 1) * w:kw])
        dhx2 = dhx * dhx
        out_ref[0, 0:1, 0:w] += jnp.sum(dhx2, axis=(0, 1))[None, :]


# ---------------------------------------------------------------------------
# Tiling plans.
# ---------------------------------------------------------------------------
def _plan_fold(bc, h, w):
    """Lane-folding plan for narrow W.  Returns (k, tbc) or None."""
    if w >= 128 or (128 % w) != 0:
        return None
    k = 128 // w
    while k > 1 and (h % k) != 0:
        k //= 2
    if k < 2:
        return None
    plane = h * w
    if plane > _TILE_ELEMS:
        return None                      # huge narrow plane: H-tiled path
    cap = max(1, _TILE_ELEMS // plane)
    if bc >= 2:
        cap = min(cap, max(1, bc // 2))  # keep >= 2 blocks for megacore
    tbc = min(cap, bc)
    while bc % tbc:
        tbc -= 1                         # exact blocking: no ragged plane block
    return k, tbc


def _plan_tiles(bc, h, w, itemsize, tile_rows):
    """General-path plan.  Returns (tbc, th)."""
    align = _sublane_align(itemsize)
    if tile_rows is not None:            # explicit override (tests / tuning)
        th = min(h, int(tile_rows))
        if th < h:
            th = max(align, (th // align) * align)
        return 1, min(th, h)
    plane = h * w
    if plane <= _TILE_ELEMS:
        # Whole plane(s) per block: pack several (b, c) planes per grid step.
        cap = max(1, _TILE_ELEMS // plane)
        if bc >= 2:
            cap = min(cap, max(1, bc // 2))   # keep >= 2 blocks for megacore
        tbc = min(cap, bc)
        while bc % tbc:
            tbc -= 1
        return tbc, h
    # Plane larger than the budget: one plane per block, tile over H.
    th = max(align, ((_TILE_ELEMS // w) // align) * align)
    return 1, min(th, h)


# ---------------------------------------------------------------------------
# Wrapper (== TVLoss.forward).
# ---------------------------------------------------------------------------
def tv_loss(x, tv_loss_weight=1.0, *, tile_rows=None, allow_fold=True):
    """Pallas-backed equivalent of TVLoss.forward for NCHW input x."""
    b, c, h, w = x.shape
    bc = b * c
    x3 = x.reshape(bc, h, w)             # free reshape, no transpose
    itemsize = x.dtype.itemsize

    fold = _plan_fold(bc, h, w) if (allow_fold and tile_rows is None) else None

    if fold is not None:
        k, tbc = fold
        hf, kw = h // k, k * w
        n_blk = bc // tbc
        sums = pl.pallas_call(
            functools.partial(_tv_folded_kernel, w=w, k=k),
            out_shape=jax.ShapeDtypeStruct((n_blk, 2, kw), jnp.float32),
            grid_spec=pltpu.PrefetchScalarGridSpec(
                num_scalar_prefetch=0,
                grid=(n_blk,),
                in_specs=[pl.BlockSpec((tbc, hf, kw), lambda i: (i, 0, 0))],
                out_specs=pl.BlockSpec((1, 2, kw), lambda i: (i, 0, 0)),
            ),
            compiler_params=pltpu.CompilerParams(
                dimension_semantics=("parallel",),
                vmem_limit_bytes=_VMEM_LIMIT_BYTES,
            ),
            cost_estimate=pl.CostEstimate(
                flops=6 * x.size, transcendentals=0,
                bytes_accessed=x.size * itemsize + n_blk * 2 * kw * 4),
        )(x3.reshape(bc, hf, kw))         # row-major fold: free, contiguous
    else:
        tbc, th = _plan_tiles(bc, h, w, itemsize, tile_rows)
        n_blk = bc // tbc
        n_ht = pl.cdiv(h, th)
        sums = pl.pallas_call(
            functools.partial(_tv_tiled_kernel, h_total=h,
                              needs_mask=(h % th) != 0),
            out_shape=jax.ShapeDtypeStruct((n_blk, 2, w), jnp.float32),
            grid_spec=pltpu.PrefetchScalarGridSpec(
                num_scalar_prefetch=0,
                grid=(n_blk, n_ht),       # reduction (h-tile) axis innermost
                in_specs=[pl.BlockSpec((tbc, th, w), lambda i, j: (i, j, 0))],
                out_specs=pl.BlockSpec((1, 2, w), lambda i, j: (i, 0, 0)),
                scratch_shapes=[pltpu.VMEM((tbc, 1, w), jnp.float32)],
            ),
            compiler_params=pltpu.CompilerParams(
                # bc-blocks are independent ("parallel", megacore-shardable);
                # the h-tile axis carries the accumulator + halo carry and MUST
                # stay "arbitrary" (sequential) -- see _tv_tiled_kernel.
                dimension_semantics=("parallel", "arbitrary"),
                vmem_limit_bytes=_VMEM_LIMIT_BYTES,
            ),
            cost_estimate=pl.CostEstimate(
                flops=6 * x.size, transcendentals=0,
                bytes_accessed=x.size * itemsize + n_blk * 2 * w * 4),
        )(x3)

    h_tv = jnp.sum(sums[:, 0, :])
    w_tv = jnp.sum(sums[:, 1, :])
    count_h = c * (h - 1) * w             # tensor_size(x[:, :, 1:, :])
    count_w = c * h * (w - 1)             # tensor_size(x[:, :, :, 1:])
    # NOTE: h == 1 or w == 1 divides by zero, matching the PyTorch module.
    return tv_loss_weight * 2.0 * (h_tv / count_h + w_tv / count_w) / b


def _tv_loss_ref(x, tv_loss_weight=1.0):
    """Pure-JAX reference for sanity checking."""
    b, c, h, w = x.shape
    xf = x.astype(jnp.float32)
    h_tv = jnp.sum((xf[:, :, 1:, :] - xf[:, :, :h - 1, :]) ** 2)
    w_tv = jnp.sum((xf[:, :, :, 1:] - xf[:, :, :, :w - 1]) ** 2)
    count_h = c * (h - 1) * w
    count_w = c * h * (w - 1)
    return tv_loss_weight * 2.0 * (h_tv / count_h + w_tv / count_w) / b


if __name__ == "__main__":
    key = jax.random.PRNGKey(0)
    k1, k2, k3 = jax.random.split(key, 3)

    # 1) Narrow-W input -> lane-folded path (k = 128 // 16 = 8).
    x1 = jax.random.normal(k1, (2, 4, 16, 16), dtype=jnp.float32)
    ref1 = _tv_loss_ref(x1, 1.0)
    out1 = jax.block_until_ready(tv_loss(x1, 1.0))
    assert jnp.allclose(out1, ref1, rtol=1e-5, atol=1e-5), (out1, ref1)

    # 2) Same input forced down the general tiled path (multi H-tile + halo).
    out1b = jax.block_until_ready(tv_loss(x1, 1.0, tile_rows=8, allow_fold=False))
    assert jnp.allclose(out1b, ref1, rtol=1e-5, atol=1e-5), (out1b, ref1)

    # 3) H not a multiple of the fold factor (k drops 8 -> 4) nor of the tile
    #    height (ragged last tile + mask) -- both paths.
    x2 = jax.random.normal(k2, (2, 3, 20, 16), dtype=jnp.float32)
    ref2 = _tv_loss_ref(x2, 0.5)
    out2 = jax.block_until_ready(tv_loss(x2, 0.5))
    assert jnp.allclose(out2, ref2, rtol=1e-5, atol=1e-5), (out2, ref2)
    out2b = jax.block_until_ready(tv_loss(x2, 0.5, tile_rows=8, allow_fold=False))
    assert jnp.allclose(out2b, ref2, rtol=1e-5, atol=1e-5), (out2b, ref2)

    # 4) Lane-dense W (= 128) -> general path with multi-plane blocks (tbc > 1).
    x3 = jax.random.normal(k3, (2, 2, 20, 128), dtype=jnp.float32)
    ref3 = _tv_loss_ref(x3, 1.0)
    out3 = jax.block_until_ready(tv_loss(x3, 1.0))
    assert jnp.allclose(out3, ref3, rtol=1e-5, atol=1e-5), (out3, ref3)

    # 5) bf16 input: native-dtype subtract, f32 accumulate (fold path).
    x4 = x1.astype(jnp.bfloat16)
    ref4 = _tv_loss_ref(x4, 1.0)
    out4 = jax.block_until_ready(tv_loss(x4, 1.0))
    assert jnp.allclose(out4, ref4, rtol=2e-2, atol=2e-2), (out4, ref4)

    print("KERNEL_OK")
</pallas_src>

<mosaic_0001>
module attributes {stable_mosaic.version = 11 : i64} {
  func.func @_tv_folded_kernel(%arg0: i32, %arg1: memref<4x2x128xf32, #tpu.memory_space<vmem>>, %arg2: memref<1x2x128xf32, #tpu.memory_space<vmem>>) attributes {dimension_semantics = [#tpu.dimension_semantics<parallel>], iteration_bounds = array<i64: 2>, scalar_prefetch = 0 : i64, scratch_operands = 0 : i64, tpu.core_type = #tpu.core_type<tc>, window_params = [{transform_indices = @transform_0, window_bounds = array<i64: 4, 2, 128>}, {transform_indices = @transform_1, window_bounds = array<i64: 1, 2, 128>}]} {
    %cst = arith.constant 0.000000e+00 : f32
    %0 = vector.broadcast %cst : f32 to vector<1x2x128xf32>
    %c0 = arith.constant 0 : index
    %c0_0 = arith.constant 0 : index
    %c0_1 = arith.constant 0 : index
    %1 = vector.load %arg2[%c0, %c0_0, %c0_1] : memref<1x2x128xf32, #tpu.memory_space<vmem>>, vector<1x2x128xf32>
    tpu.vector_store %arg2[%c0, %c0_0, %c0_1], %0 {strides = array<i32>} : memref<1x2x128xf32, #tpu.memory_space<vmem>>, vector<1x2x128xf32>,
    %c0_2 = arith.constant 0 : index
    %c0_3 = arith.constant 0 : index
    %c1 = arith.constant 1 : index
    %2 = vector.load %arg1[%c0_2, %c0_3, %c1] : memref<4x2x128xf32, #tpu.memory_space<vmem>>, vector<4x2x127xf32>
    %c0_4 = arith.constant 0 : index
    %c0_5 = arith.constant 0 : index
    %c0_6 = arith.constant 0 : index
    %3 = vector.load %arg1[%c0_4, %c0_5, %c0_6] : memref<4x2x128xf32, #tpu.memory_space<vmem>>, vector<4x2x127xf32>
    %4 = arith.subf %2, %3 : vector<4x2x127xf32>
    %5 = arith.mulf %4, %4 : vector<4x2x127xf32>
    %6 = tpu.iota {dimensions = array<i32: 2>} : vector<4x2x127xi32>
    %c15_i32 = arith.constant 15 : i32
    %7 = vector.broadcast %c15_i32 : i32 to vector<4x2x127xi32>
    %8 = arith.andi %6, %7 : vector<4x2x127xi32>
    %c15_i32_7 = arith.constant 15 : i32
    %9 = vector.broadcast %c15_i32_7 : i32 to vector<4x2x127xi32>
    %10 = arith.cmpi ne, %8, %9 : vector<4x2x127xi32>
    %cst_8 = arith.constant 0.000000e+00 : f32
    %11 = vector.broadcast %cst_8 : f32 to vector<4x2x127xf32>
    %12 = arith.select %10, %5, %11 : vector<4x2x127xi1>, vector<4x2x127xf32>
    %c0_9 = arith.constant 0 : index
    %c1_10 = arith.constant 1 : index
    %c0_11 = arith.constant 0 : index
    %13 = vector.load %arg2[%c0_9, %c1_10, %c0_11] : memref<1x2x128xf32, #tpu.memory_space<vmem>>, vector<1x1x127xf32>
    %14 = vector.shape_cast %13 : vector<1x1x127xf32> to vector<1x127xf32>
    %cst_12 = arith.constant dense<0.000000e+00> : vector<127xf32>
    %15 = vector.multi_reduction <add>, %12, %cst_12 [0, 1] : vector<4x2x127xf32> to vector<127xf32>
    %16 = vector.shape_cast %15 : vector<127xf32> to vector<1x127xf32>
    %17 = arith.addf %14, %16 : vector<1x127xf32>
    %c0_13 = arith.constant 0 : index
    %c1_14 = arith.constant 1 : index
    %c0_15 = arith.constant 0 : index
    %18 = vector.load %arg2[%c0_13, %c1_14, %c0_15] : memref<1x2x128xf32, #tpu.memory_space<vmem>>, vector<1x1x127xf32>
    %19 = vector.shape_cast %18 : vector<1x1x127xf32> to vector<1x127xf32>
    %20 = vector.shape_cast %17 : vector<1x127xf32> to vector<1x1x127xf32>
    tpu.vector_store %arg2[%c0_13, %c1_14, %c0_15], %20 {strides = array<i32>} : memref<1x2x128xf32, #tpu.memory_space<vmem>>, vector<1x1x127xf32>,
    %c0_16 = arith.constant 0 : index
    %c0_17 = arith.constant 0 : index
    %c16 = arith.constant 16 : index
    %21 = vector.load %arg1[%c0_16, %c0_17, %c16] : memref<4x2x128xf32, #tpu.memory_space<vmem>>, vector<4x2x112xf32>
    %c0_18 = arith.constant 0 : index
    %c0_19 = arith.constant 0 : index
    %c0_20 = arith.constant 0 : index
    %22 = vector.load %arg1[%c0_18, %c0_19, %c0_20] : memref<4x2x128xf32, #tpu.memory_space<vmem>>, vector<4x2x112xf32>
    %23 = arith.subf %21, %22 : vector<4x2x112xf32>
    %24 = arith.mulf %23, %23 : vector<4x2x112xf32>
    %c0_21 = arith.constant 0 : index
    %c0_22 = arith.constant 0 : index
    %c0_23 = arith.constant 0 : index
    %25 = vector.load %arg2[%c0_21, %c0_22, %c0_23] : memref<1x2x128xf32, #tpu.memory_space<vmem>>, vector<1x1x112xf32>
    %26 = vector.shape_cast %25 : vector<1x1x112xf32> to vector<1x112xf32>
    %cst_24 = arith.constant dense<0.000000e+00> : vector<112xf32>
    %27 = vector.multi_reduction <add>, %24, %cst_24 [0, 1] : vector<4x2x112xf32> to vector<112xf32>
    %28 = vector.shape_cast %27 : vector<112xf32> to vector<1x112xf32>
    %29 = arith.addf %26, %28 : vector<1x112xf32>
    %c0_25 = arith.constant 0 : index
    %c0_26 = arith.constant 0 : index
    %c0_27 = arith.constant 0 : index
    %30 = vector.load %arg2[%c0_25, %c0_26, %c0_27] : memref<1x2x128xf32, #tpu.memory_space<vmem>>, vector<1x1x112xf32>
    %31 = vector.shape_cast %30 : vector<1x1x112xf32> to vector<1x112xf32>
    %32 = vector.shape_cast %29 : vector<1x112xf32> to vector<1x1x112xf32>
    tpu.vector_store %arg2[%c0_25, %c0_26, %c0_27], %32 {strides = array<i32>} : memref<1x2x128xf32, #tpu.memory_space<vmem>>, vector<1x1x112xf32>,
    %c0_28 = arith.constant 0 : index
    %c1_29 = arith.constant 1 : index
    %c0_30 = arith.constant 0 : index
    %33 = vector.load %arg1[%c0_28, %c1_29, %c0_30] : memref<4x2x128xf32, #tpu.memory_space<vmem>>, vector<4x1x16xf32>
    %c0_31 = arith.constant 0 : index
    %c0_32 = arith.constant 0 : index
    %c112 = arith.constant 112 : index
    %34 = vector.load %arg1[%c0_31, %c0_32, %c112] : memref<4x2x128xf32, #tpu.memory_space<vmem>>, vector<4x1x16xf32>
    %35 = arith.subf %33, %34 : vector<4x1x16xf32>
    %36 = arith.mulf %35, %35 : vector<4x1x16xf32>
    %c0_33 = arith.constant 0 : index
    %c0_34 = arith.constant 0 : index
    %c0_35 = arith.constant 0 : index
    %37 = vector.load %arg2[%c0_33, %c0_34, %c0_35] : memref<1x2x128xf32, #tpu.memory_space<vmem>>, vector<1x1x16xf32>
    %38 = vector.shape_cast %37 : vector<1x1x16xf32> to vector<1x16xf32>
    %cst_36 = arith.constant dense<0.000000e+00> : vector<16xf32>
    %39 = vector.multi_reduction <add>, %36, %cst_36 [0, 1] : vector<4x1x16xf32> to vector<16xf32>
    %40 = vector.shape_cast %39 : vector<16xf32> to vector<1x16xf32>
    %41 = arith.addf %38, %40 : vector<1x16xf32>
    %c0_37 = arith.constant 0 : index
    %c0_38 = arith.constant 0 : index
    %c0_39 = arith.constant 0 : index
    %42 = vector.load %arg2[%c0_37, %c0_38, %c0_39] : memref<1x2x128xf32, #tpu.memory_space<vmem>>, vector<1x1x16xf32>
    %43 = vector.shape_cast %42 : vector<1x1x16xf32> to vector<1x16xf32>
    %44 = vector.shape_cast %41 : vector<1x16xf32> to vector<1x1x16xf32>
    tpu.vector_store %arg2[%c0_37, %c0_38, %c0_39], %44 {strides = array<i32>} : memref<1x2x128xf32, #tpu.memory_space<vmem>>, vector<1x1x16xf32>,
    return
  }
  func.func @transform_0(%arg0: i32) -> (i32, i32, i32) {
    %c0_i32 = arith.constant 0 : i32
    %c0_i32_0 = arith.constant 0 : i32
    %c0_i32_1 = arith.constant 0 : i32
    return %arg0, %c0_i32, %c0_i32_0 : i32, i32, i32
  }
  func.func @transform_1(%arg0: i32) -> (i32, i32, i32) {
    %c0_i32 = arith.constant 0 : i32
    %c0_i32_0 = arith.constant 0 : i32
    %c0_i32_1 = arith.constant 0 : i32
    return %arg0, %c0_i32, %c0_i32_0 : i32, i32, i32
  }
}

</mosaic_0001>

<llo_original>
// kernel: tpu_custom_call.1
$region0: #{tpu_custom_call.1}
  #allocation0 [shape = 'u32[]', space=smem, size = 0x4, offset = 0x4, fixed_abs, tag = 'smem constant byte address 0x4 - core index']
  #allocation1 [shape = 'u32[72,128]{1,0:T(1,128)}', space=vmem, size = 0x9000, scoped, tag = 'internal scratch']
  %s0 = inlined_call_operand.hbm [shape: f32[8,2,128], index: 0, kind: input, shape index: {}]
  %s1 = inlined_call_operand.hbm [shape: f32[2,2,128], index: 1, kind: output, shape index: {}]
  %s2 = sld [smem:[#allocation0]]
  $region41: #{tpu_custom_call.1} parent=0
    _
  %s4 = ssub.s32 1, %s2
  %s5 = scalar_select 0, %s4, %s2
  $region1: #{tpu_custom_call.1} parent=0
    #allocation2 [shape = 'u8[8192]{0}', space=vmem, size = 0x2000, scoped, tag = 'input window, operand 0']
    #allocation3 [shape = 's32[2]{0}', space=sflag, size = 0x8, scoped, tag = 'scoped memory for tpu_custom_call.1']
    #allocation4 [shape = 's32[2]{0}', space=sflag, size = 0x8, scoped, tag = 'scoped memory for tpu_custom_call.1']
    #allocation5 [shape = 'u8[2048]{0}', space=vmem, size = 0x800, scoped, tag = 'output window, operand 0']
    %6 = vsyncpa [#allocation3], 0
    %s7 = scalar_lea.sflag [#allocation3], 1
    %8 = vsyncpa %s7, 0
    %9 = vsyncpa [#allocation4], 0
    %s10 = scalar_lea.sflag [#allocation4], 1
    %11 = vsyncpa %s10, 0
    loop: start=0, step=1, limit=4
    $region2: #{tpu_custom_call.1} parent=1 // loop_pre_header
      _
    $region3: #{tpu_custom_call.1} parent=1 // loop_header
      %s13 = sphi 0, %s17
      %p14 = scmp.ge.s32.totalorder %s13, 4
      %s23 = sphi 0, %s25
      %s26 = sphi 0, %s23
      %s27 = sphi 0, %s26
      %s43 = sphi 0, %s27
      %s49 = sphi 0, %s51
      %s52 = sphi 0, %s49
      %s53 = sphi 0, %s52
      %s69 = sphi 0, %s53
    $region4: #{tpu_custom_call.1} parent=1 // loop_header_branch
      %16 = sbr.rel (%p14) target = $region8
    $region5: #{tpu_custom_call.1} parent=1 // loop_body
      %s18 = ssub.s32 %s13, 1
      %s19 = ssub.s32 %s13, 2
      %s20 = sadd.s32 %s13, 1
      %s21 = ssub.s32 %s13, %s20
      %p22 = scmp.eq.s32.totalorder %s21, 0
      %s24 = sadd.s32 %s23, 1
      %s25 = scalar_select %p22, %s23, %s24
      %p28 = pneg %p22
      %p29 = scmp.eq.s32.totalorder %s13, 1
      %p30 = por %p28, %p29
      %p31 = scmp.ne.s32.totalorder %s23, %s26
      %p32 = scmp.eq.s32.totalorder %s13, 0
      %p33 = por %p31, %p32
      %p34 = scmp.ne.s32.totalorder %s23, %s26
      %p35 = scmp.eq.s32.totalorder %s18, 1
      %p36 = por %p34, %p35
      %p37 = scmp.ne.s32.totalorder %s26, %s27
      %p38 = scmp.eq.s32.totalorder %s18, 0
      %p39 = por %p37, %p38
      %p40 = scmp.ne.s32.totalorder %s26, %s27
      %p41 = scmp.eq.s32.totalorder %s19, 1
      %p42 = por %p40, %p41
      %p44 = scmp.ne.s32.totalorder %s27, %s43
      %p45 = scmp.eq.s32.totalorder %s19, 0
      %p46 = por %p44, %p45
      %s47 = ssub.s32 %s13, %s20
      %p48 = scmp.eq.s32.totalorder %s47, 0
      %s50 = sadd.s32 %s49, 1
      %s51 = scalar_select %p48, %s49, %s50
      %p54 = pneg %p48
      %p55 = scmp.eq.s32.totalorder %s13, 1
      %p56 = por %p54, %p55
      %p57 = scmp.ne.s32.totalorder %s49, %s52
      %p58 = scmp.eq.s32.totalorder %s13, 0
      %p59 = por %p57, %p58
      %p60 = scmp.ne.s32.totalorder %s49, %s52
      %p61 = scmp.eq.s32.totalorder %s18, 1
      %p62 = por %p60, %p61
      %p63 = scmp.ne.s32.totalorder %s52, %s53
      %p64 = scmp.eq.s32.totalorder %s18, 0
      %p65 = por %p63, %p64
      %p66 = scmp.ne.s32.totalorder %s52, %s53
      %p67 = scmp.eq.s32.totalorder %s19, 1
      %p68 = por %p66, %p67
      %p70 = scmp.ne.s32.totalorder %s53, %s69
      %p71 = scmp.eq.s32.totalorder %s19, 0
      %p72 = por %p70, %p71
      %p73 = scmp.le.s32.totalorder 1, %s13
      %p74 = scmp.lt.s32.totalorder %s13, 3
      %p75 = pnand %p73, %p74
      %p76 = pneg %p75
      // Predicated region
      $region9: #{tpu_custom_call.1} parent=5 // pred_check
        _
      $region10: #{tpu_custom_call.1} parent=5 // pred_check_branch
        %78 = sbr.rel (%p75) target = $region12
      $region11: #{tpu_custom_call.1} parent=5 // pred_region
        %s79 = ssub.s32 %s13, 1
      $region12: #{tpu_custom_call.1} parent=5 // pred_fallthru
        _
      %p80 = scmp.lt.s32.totalorder %s13, 2
      // Predicated region
      $region13: #{tpu_custom_call.1} parent=5 // pred_check
        %p81 = pneg %p80
      $region14: #{tpu_custom_call.1} parent=5 // pred_check_branch
        %83 = sbr.rel (%p81) target = $region16
      $region15: #{tpu_custom_call.1} parent=5 // pred_region
        // Predicated region
        $region17: #{tpu_custom_call.1} parent=15 // pred_check
          %p84 = pneg %p33
        $region18: #{tpu_custom_call.1} parent=15 // pred_check_branch
          %86 = sbr.rel (%p84) target = $region20
        $region19: #{tpu_custom_call.1} parent=15 // pred_region
          %s87 = sand.u32 %s23, 1
          %s88 = scalar_lea.sflag [#allocation3], %s87
          %s89 = sand.u32 %s23, 1
          %s90 = smul.addr %s89, 8
          %s91 = scalar_lea.vmem [#allocation2], %s90
          %s92 = smul.u32 4, %s13
          %94 = vsyncadd %s88, 0
          %s95 = smul.addr %s92, 2
          %s96 = scalar_lea.hbm %s0, %s95
          %s97 = sshll.u32 %s96, 4
          %s98 = int_to_ptr.hbm [resolvable:$true] %s97
          %s99 = sshll.u32 %s91, 4
          %s100 = int_to_ptr.vmem [resolvable:$true] %s99
          %105 = dma.hbm_to_vmem [thread:$0]  %s98, 128, %s100, %s88, 32, 32, 2
        $region20: #{tpu_custom_call.1} parent=15 // pred_fallthru
          _
      $region16: #{tpu_custom_call.1} parent=5 // pred_fallthru
        _
      %p106 = scmp.le.s32.totalorder 1, %s13
      %p107 = scmp.lt.s32.totalorder %s13, 3
      %p108 = pnand %p106, %p107
      %p109 = pneg %p108
      // Predicated region
      $region21: #{tpu_custom_call.1} parent=5 // pred_check
        _
      $region22: #{tpu_custom_call.1} parent=5 // pred_check_branch
        %111 = sbr.rel (%p108) target = $region24
      $region23: #{tpu_custom_call.1} parent=5 // pred_region
        %s112 = ssub.s32 %s13, 1
        %s113 = sand.u32 %s26, 1
        %s114 = scalar_lea.sflag [#allocation3], %s113
        %s115 = sand.u32 %s26, 1
        %s116 = smul.addr %s115, 8
        %s117 = scalar_lea.vmem [#allocation2], %s116
        // Predicated region
        $region25: #{tpu_custom_call.1} parent=23 // pred_check
          %p118 = pneg %p39
        $region26: #{tpu_custom_call.1} parent=23 // pred_check_branch
          %120 = sbr.rel (%p118) target = $region28
        $region27: #{tpu_custom_call.1} parent=23 // pred_region
          %122 = dma.done %s114, 128
        $region28: #{tpu_custom_call.1} parent=23 // pred_fallthru
          _
        %s123 = sand.u32 %s26, 1
        %s124 = scalar_lea.sflag [#allocation3], %s123
        %s125 = sand.u32 %s26, 1
        %s126 = smul.addr %s125, 8
        %s127 = scalar_lea.vmem [#allocation2], %s126
        %p128 = pneg %p39
        %p129 = pneg %p36
        %p130 = pneg %p65
        %p131 = pneg %p62
        %s132 = sand.u32 %s52, 1
        %s133 = scalar_lea.sflag [#allocation4], %s132
        %s134 = sand.u32 %s52, 1
        %s135 = smul.addr %s134, 2
        %s136 = scalar_lea.vmem [#allocation5], %s135
        %s137 = smul.u32 4, %s18
        %138 = vst [vmem:[%s136] sm:$0x3] 0.0
        %v139 = vld [vmem:[%s117] sm:$0x3]
        %v140 = vld [vmem:[%s117 + $0x2] sm:$0x3]
        %v141 = vld [vmem:[%s117 + $0x4] sm:$0x3]
        %v142 = vld [vmem:[%s117 + $0x6] sm:$0x3]
        %147 = vrot.lane.b32.xlu0 %v139, 1
        %v148 = vpop.permute.xlu0 %147
        %149 = vrot.lane.b32.xlu0 %v140, 1
        %v150 = vpop.permute.xlu0 %149
        %151 = vrot.lane.b32.xlu0 %v141, 1
        %v152 = vpop.permute.xlu0 %151
        %153 = vrot.lane.b32.xlu0 %v142, 1
        %v154 = vpop.permute.xlu0 %153
        %v159 = vsub.f32 %v139, %v148
        %v160 = vsub.f32 %v140, %v150
        %v161 = vsub.f32 %v141, %v152
        %v162 = vsub.f32 %v142, %v154
        %v163 = vmul.f32 %v159, %v159
        %v164 = vmul.f32 %v160, %v160
        %v165 = vmul.f32 %v161, %v161
        %v166 = vmul.f32 %v162, %v162
        %v167 = vlaneseq
        %v168 = vand.u32 %v167, 127
        %v169 = vand.u32 %v168, 15
        %vm170 = vcmp.ne.s32.totalorder %v169, 15
        %175 = vrot.lane.b32.xlu0 %v163, 127
        %v176 = vpop.permute.xlu0 %175
        %177 = vrot.lane.b32.xlu0 %v164, 127
        %v178 = vpop.permute.xlu0 %177
        %179 = vrot.lane.b32.xlu0 %v165, 127
        %v180 = vpop.permute.xlu0 %179
        %181 = vrot.lane.b32.xlu0 %v166, 127
        %v182 = vpop.permute.xlu0 %181
        %v187 = vsel %vm170, %v176, 0.0
        %v188 = vsel %vm170, %v178, 0.0
        %v189 = vsel %vm170, %v180, 0.0
        %v190 = vsel %vm170, %v182, 0.0
        %v191 = vld [vmem:[%s136 + $0x1] sm:$0x1]
        %vm192 = vcmask 1033216
        %v193 = vsel %vm192, %v187, 0.0
        %v194 = vsel %vm192, %v188, 0.0
        %v195 = vadd.f32 %v193, %v194
        %v196 = vsel %vm192, %v189, 0.0
        %v197 = vadd.f32 %v195, %v196
        %v198 = vsel %vm192, %v190, 0.0
        %v199 = vadd.f32 %v197, %v198
        %v200 = vrot.slane %v199, 4
        %v201 = vadd.f32 %v199, %v200
        %v202 = vrot.slane %v201, 2
        %v203 = vadd.f32 %v201, %v202
        %v204 = vrot.slane %v203, 1
        %v205 = vadd.f32 %v203, %v204
        %v206 = vadd.f32 %v191, %v205
        %vm207 = vcmask 1032192
        %208 = vst.msk [vmem:[%s136 + $0x1] sm:$0x1] %vm207, %v206
        %v209 = vld [vmem:[%s117] sm:$0x3]
        %v210 = vld [vmem:[%s117 + $0x2] sm:$0x3]
        %v211 = vld [vmem:[%s117 + $0x4] sm:$0x3]
        %v212 = vld [vmem:[%s117 + $0x6] sm:$0x3]
        %217 = vrot.lane.b32.xlu0 %v209, 16
        %v218 = vpop.permute.xlu0 %217
        %219 = vrot.lane.b32.xlu0 %v210, 16
        %v220 = vpop.permute.xlu0 %219
        %221 = vrot.lane.b32.xlu0 %v211, 16
        %v222 = vpop.permute.xlu0 %221
        %223 = vrot.lane.b32.xlu0 %v212, 16
        %v224 = vpop.permute.xlu0 %223
        %v229 = vsub.f32 %v209, %v218
        %v230 = vsub.f32 %v210, %v220
        %v231 = vsub.f32 %v211, %v222
        %v232 = vsub.f32 %v212, %v224
        %v233 = vmul.f32 %v229, %v229
        %v234 = vmul.f32 %v230, %v230
        %v235 = vmul.f32 %v231, %v231
        %v236 = vmul.f32 %v232, %v232
        %v237 = vld [vmem:[%s136] sm:$0x1]
        %vm238 = vcmask 1041536
        %v239 = vsel %vm238, %v233, 0.0
        %v240 = vsel %vm238, %v234, 0.0
        %v241 = vadd.f32 %v239, %v240
        %v242 = vsel %vm238, %v235, 0.0
        %v243 = vadd.f32 %v241, %v242
        %v244 = vsel %vm238, %v236, 0.0
        %v245 = vadd.f32 %v243, %v244
        %v246 = vrot.slane %v245, 4
        %v247 = vadd.f32 %v245, %v246
        %v248 = vrot.slane %v247, 2
        %v249 = vadd.f32 %v247, %v248
        %v250 = vrot.slane %v249, 1
        %v251 = vadd.f32 %v249, %v250
        %253 = vrot.lane.b32.xlu0 %v251, 112
        %v254 = vpop.permute.xlu0 %253
        %v256 = vadd.f32 %v237, %v254
        %vm257 = vcmask 909312
        %258 = vst.msk [vmem:[%s136] sm:$0x1] %vm257, %v256
        %v259 = vld [vmem:[%s117 + $0x1] sm:$0x1]
        %v260 = vld [vmem:[%s117 + $0x3] sm:$0x1]
        %v261 = vld [vmem:[%s117 + $0x5] sm:$0x1]
        %v262 = vld [vmem:[%s117 + $0x7] sm:$0x1]
        %v263 = vld [vmem:[%s117] sm:$0x1]
        %v264 = vld [vmem:[%s117 + $0x2] sm:$0x1]
        %v265 = vld [vmem:[%s117 + $0x4] sm:$0x1]
        %v266 = vld [vmem:[%s117 + $0x6] sm:$0x1]
        %271 = vrot.lane.b32.xlu0 %v263, 16
        %v272 = vpop.permute.xlu0 %271
        %273 = vrot.lane.b32.xlu0 %v264, 16
        %v274 = vpop.permute.xlu0 %273
        %275 = vrot.lane.b32.xlu0 %v265, 16
        %v276 = vpop.permute.xlu0 %275
        %277 = vrot.lane.b32.xlu0 %v266, 16
        %v278 = vpop.permute.xlu0 %277
        %v283 = vsub.f32 %v259, %v272
        %v284 = vsub.f32 %v260, %v274
        %v285 = vsub.f32 %v261, %v276
        %v286 = vsub.f32 %v262, %v278
        %v287 = vmul.f32 %v283, %v283
        %v288 = vmul.f32 %v284, %v284
        %v289 = vmul.f32 %v285, %v285
        %v290 = vmul.f32 %v286, %v286
        %v291 = vld [vmem:[%s136] sm:$0x1]
        %vm292 = vcmask 122880
        %v293 = vsel %vm292, %v287, 0.0
        %v294 = vsel %vm292, %v288, 0.0
        %v295 = vadd.f32 %v293, %v294
        %v296 = vsel %vm292, %v289, 0.0
        %v297 = vadd.f32 %v295, %v296
        %v298 = vsel %vm292, %v290, 0.0
        %v299 = vadd.f32 %v297, %v298
        %v300 = vrot.slane %v299, 4
        %v301 = vadd.f32 %v299, %v300
        %v302 = vrot.slane %v301, 2
        %v303 = vadd.f32 %v301, %v302
        %v304 = vrot.slane %v303, 1
        %v305 = vadd.f32 %v303, %v304
        %v306 = vadd.f32 %v291, %v305
        %307 = vst.msk [vmem:[%s136] sm:$0x1] %vm292, %v306
        %s308 = sand.u32 %s52, 1
        %s309 = scalar_lea.sflag [#allocation4], %s308
        %s310 = sand.u32 %s52, 1
        %s311 = smul.addr %s310, 2
        %s312 = scalar_lea.vmem [#allocation5], %s311
        // Predicated region
        $region29: #{tpu_custom_call.1} parent=23 // pred_check
          %p313 = pneg %p62
        $region30: #{tpu_custom_call.1} parent=23 // pred_check_branch
          %315 = sbr.rel (%p313) target = $region32
        $region31: #{tpu_custom_call.1} parent=23 // pred_region
          %317 = vsyncadd %s309, 0
          %s318 = smul.addr %s18, 2
          %s319 = scalar_lea.hbm %s1, %s318
          %s321 = sshll.u32 %s312, 4
          %s322 = int_to_ptr.vmem [resolvable:$true] %s321
          %s323 = sshll.u32 %s319, 4
          %s324 = int_to_ptr.hbm [resolvable:$true] %s323
          %326 = dma.vmem_to_hbm [thread:$0]  %s322, 32, %s324, %s309
        $region32: #{tpu_custom_call.1} parent=23 // pred_fallthru
          _
      $region24: #{tpu_custom_call.1} parent=5 // pred_fallthru
        _
      %p327 = scmp.le.s32.totalorder 2, %s13
      // Predicated region
      $region33: #{tpu_custom_call.1} parent=5 // pred_check
        %p328 = pneg %p327
      $region34: #{tpu_custom_call.1} parent=5 // pred_check_branch
        %330 = sbr.rel (%p328) target = $region36
      $region35: #{tpu_custom_call.1} parent=5 // pred_region
        %s331 = ssub.s32 %s13, 2
        // Predicated region
        $region37: #{tpu_custom_call.1} parent=35 // pred_check
          %p332 = pneg %p68
        $region38: #{tpu_custom_call.1} parent=35 // pred_check_branch
          %334 = sbr.rel (%p332) target = $region40
        $region39: #{tpu_custom_call.1} parent=35 // pred_region
          %s335 = sand.u32 %s53, 1
          %s336 = scalar_lea.sflag [#allocation4], %s335
          %s337 = sand.u32 %s53, 1
          %s338 = smul.addr %s337, 2
          %s339 = scalar_lea.vmem [#allocation5], %s338
          %341 = dma.done %s336, 32
        $region40: #{tpu_custom_call.1} parent=35 // pred_fallthru
          _
      $region36: #{tpu_custom_call.1} parent=5 // pred_fallthru
        _
    $region6: #{tpu_custom_call.1} parent=1 // loop_footer
      %s17 = sadd.s32 1, %s13
    $region7: #{tpu_custom_call.1} parent=1 // loop_footer_branch
      %12 = sbr.rel target = $region3
    $region8: #{tpu_custom_call.1} parent=1 // loop_exit
      _
    %342 = vsyncpa [#allocation3], 1
    %s343 = scalar_lea.sflag [#allocation3], 1
    %344 = vsyncpa %s343, 1
    %345 = vsyncpa [#allocation4], 1
    %s346 = scalar_lea.sflag [#allocation4], 1
    %347 = vsyncpa %s346, 1

</llo_original>
